<compile_context>
chip_gen: v7x
topology: tpu7x:2x2x1
jax: 0.10.0
libtpu: 0.0.40
codegen_flags: <defaults>
</compile_context>

<pallas_src>
import math

import numpy as np
import jax
import jax.numpy as jnp
from jax import lax
from jax.experimental import pallas as pl
from jax.experimental.pallas import tpu as pltpu

_LANE = 128
_SUBLANE = 8
_VMEM_LIMIT = 32 * 1024 * 1024  # fits the 64 MiB v7x ceiling with headroom


# ---------------------------------------------------------------------------
# helpers
# ---------------------------------------------------------------------------

def _round_up(n, m):
    return ((n + m - 1) // m) * m


def _row_tile(n, cap=256):
    """Row tile: multiple of 8; when < cap it equals the padded extent (full block)."""
    return min(cap, _round_up(n, _SUBLANE))


def _pad2d(x, rows, cols):
    r, c = x.shape
    return jnp.pad(x, ((0, rows - r), (0, cols - c)))


def _mish(y):
    # mish(y) = y*tanh(softplus(y)) = y*(t^2+2t)/(t^2+2t+2), t=exp(y)
    # one EUP exp + one approx EUP reciprocal instead of exp+log1p+tanh.
    t = jnp.exp(jnp.minimum(y, 20.0))
    u = t * (t + 2.0)
    return y * u * pl.reciprocal(u + 2.0, approx=True)


# ---------------------------------------------------------------------------
# Kernel 1: fused embeddings MLP + row replacement + L2 normalize
# ---------------------------------------------------------------------------

def _emb_mlp_kernel(x_ref, w1_ref, b1_ref, w2_ref, b2_ref, w3_ref, b3_ref,
                    repl_ref, mask_ref, o_ref):
    h = jnp.dot(x_ref[...], w1_ref[...], preferred_element_type=jnp.float32) + b1_ref[...]
    h = _mish(h)
    h = jnp.dot(h.astype(jnp.bfloat16), w2_ref[...],
                preferred_element_type=jnp.float32) + b2_ref[...]
    h = _mish(h)
    h = jnp.dot(h.astype(jnp.bfloat16), w3_ref[...],
                preferred_element_type=jnp.float32) + b3_ref[...]
    # x[not_hea_id] = embeddings[...]
    y = jnp.where(mask_ref[...] > 0.0, repl_ref[...], h)
    # F.normalize(x, p=2, dim=-1)
    n2 = jnp.sum(y * y, axis=-1, keepdims=True)
    o_ref[...] = y * lax.rsqrt(jnp.maximum(n2, 1e-24))


def emb_mlp(x_bf, w1, b1, w2, b2, w3, b3, repl, mask, row_tile):
    n_pad, in_p = x_bf.shape
    h2_p = w1.shape[1]
    h_p = w3.shape[1]
    rowspec = lambda c: pl.BlockSpec((row_tile, c), lambda i: (i, 0))
    full = lambda r, c: pl.BlockSpec((r, c), lambda i: (0, 0))
    return pl.pallas_call(
        _emb_mlp_kernel,
        grid=(n_pad // row_tile,),
        in_specs=[rowspec(in_p),
                  full(in_p, h2_p), full(1, h2_p),
                  full(h2_p, h_p), full(1, h_p),
                  full(h_p, h_p), full(1, h_p),
                  rowspec(h_p), rowspec(1)],
        out_specs=rowspec(h_p),
        out_shape=jax.ShapeDtypeStruct((n_pad, h_p), jnp.float32),
        compiler_params=pltpu.CompilerParams(
            dimension_semantics=("parallel",), vmem_limit_bytes=_VMEM_LIMIT),
    )(x_bf, w1, b1, w2, b2, w3, b3, repl, mask)


# ---------------------------------------------------------------------------
# Kernel 2: fused GCN layer  relu(A_norm @ relu(X @ W + b))
# ---------------------------------------------------------------------------

def _gcn_layer_kernel(x_ref, w_ref, b_ref, a_ref, o_ref, acc_ref):
    k = pl.program_id(1)

    @pl.when(k == 0)
    def _():
        acc_ref[...] = jnp.zeros_like(acc_ref)

    # GCNConv lin + internal ReLU, computed per K-tile (never leaves VMEM)
    xlin = jnp.dot(x_ref[...], w_ref[...], preferred_element_type=jnp.float32) + b_ref[...]
    xlin = jnp.maximum(xlin, 0.0)
    # propagate: A_norm tile @ X_lin tile, f32 accumulation
    acc_ref[...] += jnp.dot(a_ref[...], xlin.astype(jnp.bfloat16),
                            preferred_element_type=jnp.float32)

    @pl.when(k == pl.num_programs(1) - 1)
    def _():
        o_ref[...] = jnp.maximum(acc_ref[...], 0.0)   # outer activation (ReLU)


def gcn_layer(x, a_norm_bf, w, b, tile):
    n_pad, h_p = x.shape
    grid = (n_pad // tile, n_pad // tile)
    return pl.pallas_call(
        _gcn_layer_kernel,
        grid=grid,
        in_specs=[pl.BlockSpec((tile, h_p), lambda i, k: (k, 0)),     # X rows for K-tile
                  pl.BlockSpec((h_p, h_p), lambda i, k: (0, 0)),      # W (bf16, resident)
                  pl.BlockSpec((1, h_p), lambda i, k: (0, 0)),        # bias
                  pl.BlockSpec((tile, tile), lambda i, k: (i, k))],   # A_norm tile
        out_specs=pl.BlockSpec((tile, h_p), lambda i, k: (i, 0)),
        out_shape=jax.ShapeDtypeStruct((n_pad, h_p), jnp.float32),
        scratch_shapes=[pltpu.VMEM((tile, h_p), jnp.float32)],
        compiler_params=pltpu.CompilerParams(
            dimension_semantics=("parallel", "arbitrary"),
            vmem_limit_bytes=_VMEM_LIMIT),
        # FIX: argument order now matches in_specs / kernel signature (X, W, b, A).
    )(x.astype(jnp.bfloat16), w, b, a_norm_bf)


# ---------------------------------------------------------------------------
# Kernel 3: head  sigmoid(lin2(relu(lin1(x + x1))))
# ---------------------------------------------------------------------------

def _head_kernel(xc_ref, x1_ref, w1_ref, b1_ref, w2_ref, b2_ref, o_ref):
    y = (xc_ref[...] + x1_ref[...]).astype(jnp.bfloat16)     # residual
    h = jnp.dot(y, w1_ref[...], preferred_element_type=jnp.float32) + b1_ref[...]
    h = jnp.maximum(h, 0.0)
    z = jnp.dot(h.astype(jnp.bfloat16), w2_ref[...],
                preferred_element_type=jnp.float32) + b2_ref[...]
    o_ref[...] = 0.5 * (jnp.tanh(0.5 * z) + 1.0)              # stable sigmoid (EUP tanh)


def mlp_head(xc, x1, w1, b1, w2, b2, tile):
    n_pad, h_p = xc.shape
    h2_p = w1.shape[1]
    out_p = w2.shape[1]
    rowspec = pl.BlockSpec((tile, h_p), lambda i: (i, 0))
    full = lambda r, c: pl.BlockSpec((r, c), lambda i: (0, 0))
    return pl.pallas_call(
        _head_kernel,
        grid=(n_pad // tile,),
        in_specs=[rowspec, rowspec, full(h_p, h2_p), full(1, h2_p),
                  full(h2_p, out_p), full(1, out_p)],
        out_specs=pl.BlockSpec((tile, out_p), lambda i: (i, 0)),
        out_shape=jax.ShapeDtypeStruct((n_pad, out_p), jnp.float32),
        compiler_params=pltpu.CompilerParams(
            dimension_semantics=("parallel",), vmem_limit_bytes=_VMEM_LIMIT),
    )(xc, x1, w1, b1, w2, b2)


# ---------------------------------------------------------------------------
# Kernel 4: TransE positive + negative distances (one call, lane-dense outputs)
# ---------------------------------------------------------------------------

def _transe_dist_kernel(head_ref, rel_ref, tail_ref, negh_ref, pos_ref, neg_ref):
    rel = rel_ref[...]
    tail = tail_ref[...]
    dp = head_ref[...] + rel - tail
    dn = negh_ref[...] + rel - tail
    pos = jnp.sqrt(jnp.sum(dp * dp, axis=-1, keepdims=True))
    neg = jnp.sqrt(jnp.sum(dn * dn, axis=-1, keepdims=True))
    # lane-dense stores: broadcast the (tile,1) column across 128 lanes
    pos_ref[...] = jnp.broadcast_to(pos, pos_ref.shape)
    neg_ref[...] = jnp.broadcast_to(neg, neg_ref.shape)


def transe_scores(head, rel, tail, negh, tile):
    e_pad, h_p = head.shape
    rowspec = pl.BlockSpec((tile, h_p), lambda i: (i, 0))
    outspec = pl.BlockSpec((tile, _LANE), lambda i: (i, 0))
    return pl.pallas_call(
        _transe_dist_kernel,
        grid=(e_pad // tile,),
        in_specs=[rowspec, rowspec, rowspec, rowspec],
        out_specs=(outspec, outspec),
        out_shape=(jax.ShapeDtypeStruct((e_pad, _LANE), jnp.float32),
                   jax.ShapeDtypeStruct((e_pad, _LANE), jnp.float32)),
        compiler_params=pltpu.CompilerParams(dimension_semantics=("parallel",)),
    )(head, rel, tail, negh)


# ---------------------------------------------------------------------------
# Kernel 5: semantic score  || x[hea] - (maskT @ (head+rel)) / counts ||
# ---------------------------------------------------------------------------

def _semantic_kernel(maskT_ref, head_ref, rel_ref, cnt_ref, xh_ref, o_ref, acc_ref):
    k = pl.program_id(1)

    @pl.when(k == 0)
    def _():
        acc_ref[...] = jnp.zeros_like(acc_ref)

    te = (head_ref[...] + rel_ref[...]).astype(jnp.bfloat16)   # tail_estimate terms
    acc_ref[...] += jnp.dot(maskT_ref[...], te, preferred_element_type=jnp.float32)

    @pl.when(k == pl.num_programs(1) - 1)
    def _():
        # NOTE: counts==0 (hea node with no in-edge) gives inf/NaN like the PyTorch ref.
        tail_est = acc_ref[...] / cnt_ref[...]
        d = xh_ref[...] - tail_est
        dist = jnp.sqrt(jnp.sum(d * d, axis=-1, keepdims=True))
        o_ref[...] = jnp.broadcast_to(dist, o_ref.shape)


def semantic_scores(maskT_bf, head, rel, counts, x_hea, hea_tile, edge_tile):
    nh_pad, e_pad = maskT_bf.shape
    h_p = head.shape[1]
    grid = (nh_pad // hea_tile, e_pad // edge_tile)
    return pl.pallas_call(
        _semantic_kernel,
        grid=grid,
        in_specs=[pl.BlockSpec((hea_tile, edge_tile), lambda i, k: (i, k)),
                  pl.BlockSpec((edge_tile, h_p), lambda i, k: (k, 0)),
                  pl.BlockSpec((edge_tile, h_p), lambda i, k: (k, 0)),
                  pl.BlockSpec((hea_tile, 1), lambda i, k: (i, 0)),
                  pl.BlockSpec((hea_tile, h_p), lambda i, k: (i, 0))],
        out_specs=pl.BlockSpec((hea_tile, _LANE), lambda i, k: (i, 0)),
        out_shape=jax.ShapeDtypeStruct((nh_pad, _LANE), jnp.float32),
        scratch_shapes=[pltpu.VMEM((hea_tile, h_p), jnp.float32)],
        compiler_params=pltpu.CompilerParams(
            dimension_semantics=("parallel", "arbitrary")),
    )(maskT_bf, head, rel, counts, x_hea)


# ---------------------------------------------------------------------------
# Parameter init (weights pre-transposed, lane-padded, pre-cast to bf16)
# ---------------------------------------------------------------------------

def init_params(key, in_channels, hidden, out_channels, num_layers,
                embeddings_num, edgetype_num, embeddings_dict):
    h2 = hidden // 2
    in_p = _round_up(in_channels, _LANE)
    h2_p = _round_up(h2, _LANE)
    h_p = _round_up(hidden, _LANE)
    out_p = _round_up(out_channels, _LANE)

    keys = jax.random.split(key, 8 + num_layers)

    def lin(k, fan_in, fan_out, in_pad, out_pad):
        k1, k2 = jax.random.split(k)
        bound = 1.0 / math.sqrt(fan_in)
        w = jax.random.uniform(k1, (fan_out, fan_in), jnp.float32, -bound, bound)
        b = jax.random.uniform(k2, (fan_out,), jnp.float32, -bound, bound)
        wt = _pad2d(w.T, in_pad, out_pad).astype(jnp.bfloat16)       # [in, out] bf16
        bp = jnp.pad(b, (0, out_pad - fan_out)).reshape(1, out_pad)  # f32 bias
        return wt, bp

    params = {"dims": (in_channels, hidden, out_channels)}
    params["emb_lin1"] = lin(keys[0], in_channels, h2, in_p, h2_p)
    params["emb_lin2"] = lin(keys[1], h2, hidden, h2_p, h_p)
    params["emb_lin3"] = lin(keys[2], hidden, hidden, h_p, h_p)
    params["lin1"] = lin(keys[3], hidden, h2, h_p, h2_p)
    params["lin2"] = lin(keys[4], h2, out_channels, h2_p, out_p)

    bound = 6.0 / math.sqrt(hidden)
    emb = jax.random.uniform(keys[5], (embeddings_num, hidden), jnp.float32, -bound, bound)
    params["embeddings"] = _pad2d(emb, embeddings_num, h_p)

    emb_edge = jax.random.uniform(keys[6], (edgetype_num, hidden), jnp.float32, -bound, bound)
    emb_edge = emb_edge / jnp.maximum(
        jnp.sqrt(jnp.sum(emb_edge * emb_edge, axis=-1, keepdims=True)), 1e-12)
    params["embeddings_edge"] = _pad2d(emb_edge, edgetype_num, h_p)

    # GCNConv internal Linear layers (conv1 + (num_layers - 1) extra convs)
    params["conv_lins"] = [lin(keys[7 + i], hidden, hidden, h_p, h_p)
                           for i in range(num_layers)]

    max_key = max(embeddings_dict.keys())
    tbl = np.zeros((int(max_key) + 1, 1), dtype=np.float32)
    for k, v in embeddings_dict.items():
        tbl[int(k), 0] = v
    params["embeddings_dict"] = jnp.asarray(tbl)
    return params


def build_norm_adj(edge_index, num_nodes):
    """Dense normalized adjacency for GCNConv (self-loops, aggr='add')."""
    # TODO(synk): for large KGs this O(N^2) dense adjacency should become a
    # scalar-prefetched sparse/segment formulation driving the propagate index_map.
    self_loops = jnp.arange(num_nodes, dtype=edge_index.dtype)
    row = jnp.concatenate([edge_index[0], self_loops])   # source
    col = jnp.concatenate([edge_index[1], self_loops])   # target
    deg = jnp.zeros((num_nodes,), jnp.float32).at[col].add(1.0)
    dis = deg ** -0.5
    norm = dis[row] * dis[col]
    return jnp.zeros((num_nodes, num_nodes), jnp.float32).at[col, row].add(norm)


# ---------------------------------------------------------------------------
# Forward
# ---------------------------------------------------------------------------

def gcn_forward(params, x, x_id, x_attr, edge_index, edge_attr, edge_weight,
                hea_id, not_hea_id, neg_idx):
    del x_attr, edge_weight   # edge_weight lands in GCNConv's unused fill_value slot
    in_c, hidden, out_c = params["dims"]
    in_p = params["emb_lin1"][0].shape[0]
    h_p = params["emb_lin3"][0].shape[1]

    N = x.shape[0]
    E = edge_index.shape[1]
    n_hea = hea_id.shape[0]

    t_node = _row_tile(N)       # node-row tile (also K tile of the propagate matmul)
    t_edge = _row_tile(E)       # edge-row tile (K tile of the mask matmul)
    t_hea = _row_tile(n_hea)
    n_pad = _round_up(N, t_node)
    e_pad = _round_up(E, t_edge)
    nh_pad = _round_up(n_hea, t_hea)

    # --- fused embeddings MLP + row replacement + L2 normalize ---------------
    emb_idx = params["embeddings_dict"][
        x_id[not_hea_id].astype(jnp.int32).reshape(-1)].astype(jnp.int32).reshape(-1)
    repl = jnp.zeros((N, h_p), jnp.float32).at[not_hea_id].set(params["embeddings"][emb_idx])
    mask = jnp.zeros((N, 1), jnp.float32).at[not_hea_id].set(1.0)

    x_bf = _pad2d(x.astype(jnp.float32), n_pad, in_p).astype(jnp.bfloat16)
    w1, b1 = params["emb_lin1"]
    w2, b2 = params["emb_lin2"]
    w3, b3 = params["emb_lin3"]
    x_norm = emb_mlp(x_bf, w1, b1, w2, b2, w3, b3,
                     _pad2d(repl, n_pad, h_p), _pad2d(mask, n_pad, 1), t_node)

    # --- TransE-style scores (gathers stay in plain JAX glue) ----------------
    head = jnp.take(x_norm, edge_index[0], axis=0)
    tail = jnp.take(x_norm, edge_index[1], axis=0)
    relation = jnp.take(params["embeddings_edge"], edge_attr, axis=0)
    # TODO(synk): torch.randint negative sampling replaced by caller-supplied neg_idx.
    negh = jnp.take(x_norm, neg_idx, axis=0)

    head_p = _pad2d(head, e_pad, h_p)
    tail_p = _pad2d(tail, e_pad, h_p)
    rel_p = _pad2d(relation, e_pad, h_p)
    negh_p = _pad2d(negh, e_pad, h_p)

    pos_w, neg_w = transe_scores(head_p, rel_p, tail_p, negh_p, t_edge)
    pos_score = pos_w[:E, 0]
    neg_score = neg_w[:E, 0]

    mask_e = (hea_id[:, None] == edge_index[1][None, :])         # [n_hea, E]
    counts = jnp.sum(mask_e, axis=1).astype(jnp.float32)
    maskT_bf = _pad2d(mask_e.astype(jnp.bfloat16), nh_pad, e_pad)
    counts_p = jnp.pad(counts, (0, nh_pad - n_hea), constant_values=1.0).reshape(-1, 1)
    x_hea_p = _pad2d(jnp.take(x_norm, hea_id, axis=0), nh_pad, h_p)
    sem_w = semantic_scores(maskT_bf, head_p, rel_p, counts_p, x_hea_p, t_hea, t_edge)
    score_semantic = sem_w[:n_hea, 0:1]

    # --- GCN stack: one fused kernel per layer -------------------------------
    a_norm_bf = _pad2d(build_norm_adj(edge_index, N), n_pad, n_pad).astype(jnp.bfloat16)
    x_cur = x_norm
    x1 = x_norm
    for (wc, bc) in params["conv_lins"]:
        x_cur = gcn_layer(x_cur, a_norm_bf, wc, bc, t_node)
        # dropout: identity in eval mode

    # --- head: residual add + lin1 + relu + lin2 + sigmoid (one fused kernel)
    wl1, bl1 = params["lin1"]
    wl2, bl2 = params["lin2"]
    out_pad_arr = mlp_head(x_cur, x1, wl1, bl1, wl2, bl2, t_node)
    out = out_pad_arr[:N, :out_c]

    return out, (pos_score, neg_score, score_semantic)


# ---------------------------------------------------------------------------
# Example run
# ---------------------------------------------------------------------------

if __name__ == "__main__":
    key = jax.random.PRNGKey(0)

    # Small synthetic graph
    N, E = 16, 32
    in_channels, hidden, out_channels = 8, 32, 4
    num_layers = 3
    embeddings_num, edgetype_num = 10, 5
    embeddings_dict = {k: (k * 3) % embeddings_num for k in range(10)}

    k_x, k_neg = jax.random.split(key)
    x = jax.random.normal(k_x, (N, in_channels), jnp.float32)
    x_id = jnp.asarray(np.arange(N) % 10, jnp.int32)
    x_attr_np = np.array([1, 0] * (N // 2), dtype=np.int32)       # alternate hea / not-hea
    x_attr = jnp.asarray(x_attr_np)

    # edges: targets cycle through all nodes so every hea node has in-edges
    src = np.arange(E, dtype=np.int32) * 7 % N
    dst = (np.arange(E, dtype=np.int32) * 5 + 1) % N
    dst[:N] = np.arange(N, dtype=np.int32)                        # guarantee coverage
    edge_index = jnp.asarray(np.stack([src, dst]), jnp.int32)     # [2, E]
    edge_attr = jnp.asarray(np.arange(E) % edgetype_num, jnp.int32)
    edge_weight = jnp.ones((E,), jnp.float32)

    # host-side (static) boolean index sets, like torch.where on x_attr
    hea_id = jnp.asarray(np.where(x_attr_np == 1)[0], jnp.int32)
    not_hea_id = jnp.asarray(np.where(x_attr_np != 1)[0], jnp.int32)
    neg_idx = jax.random.randint(k_neg, (E,), 0, N, jnp.int32)

    params = init_params(key, in_channels, hidden, out_channels, num_layers,
                         embeddings_num, edgetype_num, embeddings_dict)

    out, (pos_score, neg_score, score_semantic) = gcn_forward(
        params, x, x_id, x_attr, edge_index, edge_attr, edge_weight,
        hea_id, not_hea_id, neg_idx)

    jax.block_until_ready((out, pos_score, neg_score, score_semantic))
    assert out.shape == (N, out_channels)
    assert pos_score.shape == (E,) and neg_score.shape == (E,)
    assert score_semantic.shape == (hea_id.shape[0], 1)
    assert bool(jnp.all(jnp.isfinite(out)))
    assert bool(jnp.all(jnp.isfinite(pos_score)))
    assert bool(jnp.all(jnp.isfinite(neg_score)))
    assert bool(jnp.all(jnp.isfinite(score_semantic)))
    print("KERNEL_OK")
</pallas_src>

<mosaic_0001>
module attributes {stable_mosaic.version = 11 : i64} {
  func.func @_emb_mlp_kernel(%arg0: i32, %arg1: memref<16x128xbf16, #tpu.memory_space<vmem>>, %arg2: memref<128x128xbf16, #tpu.memory_space<vmem>>, %arg3: memref<1x128xf32, #tpu.memory_space<vmem>>, %arg4: memref<128x128xbf16, #tpu.memory_space<vmem>>, %arg5: memref<1x128xf32, #tpu.memory_space<vmem>>, %arg6: memref<128x128xbf16, #tpu.memory_space<vmem>>, %arg7: memref<1x128xf32, #tpu.memory_space<vmem>>, %arg8: memref<16x128xf32, #tpu.memory_space<vmem>>, %arg9: memref<16x1xf32, #tpu.memory_space<vmem>>, %arg10: memref<16x128xf32, #tpu.memory_space<vmem>>) attributes {dimension_semantics = [#tpu.dimension_semantics<parallel>], iteration_bounds = array<i64: 1>, scalar_prefetch = 0 : i64, scratch_operands = 0 : i64, tpu.core_type = #tpu.core_type<tc>, window_params = [{transform_indices = @transform_0, window_bounds = array<i64: 16, 128>}, {pipeline_mode = #tpu.pipeline_mode<synchronous>, transform_indices = @transform_1, window_bounds = array<i64: 128, 128>}, {pipeline_mode = #tpu.pipeline_mode<synchronous>, transform_indices = @transform_2, window_bounds = array<i64: 1, 128>}, {pipeline_mode = #tpu.pipeline_mode<synchronous>, transform_indices = @transform_3, window_bounds = array<i64: 128, 128>}, {pipeline_mode = #tpu.pipeline_mode<synchronous>, transform_indices = @transform_4, window_bounds = array<i64: 1, 128>}, {pipeline_mode = #tpu.pipeline_mode<synchronous>, transform_indices = @transform_5, window_bounds = array<i64: 128, 128>}, {pipeline_mode = #tpu.pipeline_mode<synchronous>, transform_indices = @transform_6, window_bounds = array<i64: 1, 128>}, {transform_indices = @transform_7, window_bounds = array<i64: 16, 128>}, {transform_indices = @transform_8, window_bounds = array<i64: 16, 1>}, {transform_indices = @transform_9, window_bounds = array<i64: 16, 128>}]} {
    %c0 = arith.constant 0 : index
    %c0_0 = arith.constant 0 : index
    %0 = vector.load %arg1[%c0, %c0_0] : memref<16x128xbf16, #tpu.memory_space<vmem>>, vector<16x128xbf16>
    %c0_1 = arith.constant 0 : index
    %c0_2 = arith.constant 0 : index
    %1 = vector.load %arg2[%c0_1, %c0_2] : memref<128x128xbf16, #tpu.memory_space<vmem>>, vector<128x128xbf16>
    %cst = arith.constant dense<0.000000e+00> : vector<16x128xf32>
    %2 = tpu.matmul %0, %1, %cst {dimension_numbers = #tpu.dot_dimension_numbers<[1], [0], [0], [1], [0, 0, 1, 1], [], []>} : vector<16x128xbf16>, vector<128x128xbf16>, vector<16x128xf32> -> vector<16x128xf32>
    %c0_3 = arith.constant 0 : index
    %c0_4 = arith.constant 0 : index
    %3 = vector.load %arg3[%c0_3, %c0_4] : memref<1x128xf32, #tpu.memory_space<vmem>>, vector<1x128xf32>
    %4 = vector.broadcast %3 : vector<1x128xf32> to vector<16x128xf32>
    %5 = arith.addf %2, %4 : vector<16x128xf32>
    %cst_5 = arith.constant 2.000000e+01 : f32
    %6 = vector.broadcast %cst_5 : f32 to vector<16x128xf32>
    %7 = arith.minimumf %5, %6 : vector<16x128xf32>
    %8 = math.exp %7 : vector<16x128xf32>
    %cst_6 = arith.constant 2.000000e+00 : f32
    %9 = vector.broadcast %cst_6 : f32 to vector<16x128xf32>
    %10 = arith.addf %8, %9 : vector<16x128xf32>
    %11 = arith.mulf %8, %10 : vector<16x128xf32>
    %12 = arith.mulf %5, %11 : vector<16x128xf32>
    %cst_7 = arith.constant 2.000000e+00 : f32
    %13 = vector.broadcast %cst_7 : f32 to vector<16x128xf32>
    %14 = arith.addf %11, %13 : vector<16x128xf32>
    %15 = tpu.reciprocal %14 {approx = true} : vector<16x128xf32> -> vector<16x128xf32>
    %16 = arith.mulf %12, %15 : vector<16x128xf32>
    %17 = arith.truncf %16 : vector<16x128xf32> to vector<16x128xbf16>
    %c0_8 = arith.constant 0 : index
    %c0_9 = arith.constant 0 : index
    %18 = vector.load %arg4[%c0_8, %c0_9] : memref<128x128xbf16, #tpu.memory_space<vmem>>, vector<128x128xbf16>
    %cst_10 = arith.constant dense<0.000000e+00> : vector<16x128xf32>
    %19 = tpu.matmul %17, %18, %cst_10 {dimension_numbers = #tpu.dot_dimension_numbers<[1], [0], [0], [1], [0, 0, 1, 1], [], []>} : vector<16x128xbf16>, vector<128x128xbf16>, vector<16x128xf32> -> vector<16x128xf32>
    %c0_11 = arith.constant 0 : index
    %c0_12 = arith.constant 0 : index
    %20 = vector.load %arg5[%c0_11, %c0_12] : memref<1x128xf32, #tpu.memory_space<vmem>>, vector<1x128xf32>
    %21 = vector.broadcast %20 : vector<1x128xf32> to vector<16x128xf32>
    %22 = arith.addf %19, %21 : vector<16x128xf32>
    %cst_13 = arith.constant 2.000000e+01 : f32
    %23 = vector.broadcast %cst_13 : f32 to vector<16x128xf32>
    %24 = arith.minimumf %22, %23 : vector<16x128xf32>
    %25 = math.exp %24 : vector<16x128xf32>
    %cst_14 = arith.constant 2.000000e+00 : f32
    %26 = vector.broadcast %cst_14 : f32 to vector<16x128xf32>
    %27 = arith.addf %25, %26 : vector<16x128xf32>
    %28 = arith.mulf %25, %27 : vector<16x128xf32>
    %29 = arith.mulf %22, %28 : vector<16x128xf32>
    %cst_15 = arith.constant 2.000000e+00 : f32
    %30 = vector.broadcast %cst_15 : f32 to vector<16x128xf32>
    %31 = arith.addf %28, %30 : vector<16x128xf32>
    %32 = tpu.reciprocal %31 {approx = true} : vector<16x128xf32> -> vector<16x128xf32>
    %33 = arith.mulf %29, %32 : vector<16x128xf32>
    %34 = arith.truncf %33 : vector<16x128xf32> to vector<16x128xbf16>
    %c0_16 = arith.constant 0 : index
    %c0_17 = arith.constant 0 : index
    %35 = vector.load %arg6[%c0_16, %c0_17] : memref<128x128xbf16, #tpu.memory_space<vmem>>, vector<128x128xbf16>
    %cst_18 = arith.constant dense<0.000000e+00> : vector<16x128xf32>
    %36 = tpu.matmul %34, %35, %cst_18 {dimension_numbers = #tpu.dot_dimension_numbers<[1], [0], [0], [1], [0, 0, 1, 1], [], []>} : vector<16x128xbf16>, vector<128x128xbf16>, vector<16x128xf32> -> vector<16x128xf32>
    %c0_19 = arith.constant 0 : index
    %c0_20 = arith.constant 0 : index
    %37 = vector.load %arg7[%c0_19, %c0_20] : memref<1x128xf32, #tpu.memory_space<vmem>>, vector<1x128xf32>
    %38 = vector.broadcast %37 : vector<1x128xf32> to vector<16x128xf32>
    %39 = arith.addf %36, %38 : vector<16x128xf32>
    %c0_21 = arith.constant 0 : index
    %c0_22 = arith.constant 0 : index
    %40 = vector.load %arg9[%c0_21, %c0_22] : memref<16x1xf32, #tpu.memory_space<vmem>>, vector<16x1xf32>
    %cst_23 = arith.constant 0.000000e+00 : f32
    %41 = vector.broadcast %cst_23 : f32 to vector<16x1xf32>
    %42 = arith.cmpf ogt, %40, %41 : vector<16x1xf32>
    %c0_24 = arith.constant 0 : index
    %c0_25 = arith.constant 0 : index
    %43 = vector.load %arg8[%c0_24, %c0_25] : memref<16x128xf32, #tpu.memory_space<vmem>>, vector<16x128xf32>
    %44 = vector.shape_cast %42 : vector<16x1xi1> to vector<16x1xi1>
    %45 = vector.broadcast %44 : vector<16x1xi1> to vector<16x128xi1>
    %46 = arith.select %45, %43, %39 : vector<16x128xi1>, vector<16x128xf32>
    %47 = arith.mulf %46, %46 : vector<16x128xf32>
    %cst_26 = arith.constant dense<0.000000e+00> : vector<16xf32>
    %48 = vector.multi_reduction <add>, %47, %cst_26 [1] : vector<16x128xf32> to vector<16xf32>
    %49 = vector.shape_cast %48 : vector<16xf32> to vector<16x1xf32>
    %cst_27 = arith.constant 1.000000e-24 : f32
    %50 = vector.broadcast %cst_27 : f32 to vector<16x1xf32>
    %51 = arith.maximumf %49, %50 : vector<16x1xf32>
    %52 = math.rsqrt %51 : vector<16x1xf32>
    %53 = vector.broadcast %52 : vector<16x1xf32> to vector<16x128xf32>
    %54 = arith.mulf %46, %53 : vector<16x128xf32>
    %c0_28 = arith.constant 0 : index
    %c0_29 = arith.constant 0 : index
    %55 = vector.load %arg10[%c0_28, %c0_29] : memref<16x128xf32, #tpu.memory_space<vmem>>, vector<16x128xf32>
    tpu.vector_store %arg10[%c0_28, %c0_29], %54 {strides = array<i32>} : memref<16x128xf32, #tpu.memory_space<vmem>>, vector<16x128xf32>,
    return
  }
  func.func @transform_0(%arg0: i32) -> (i32, i32) {
    %c0_i32 = arith.constant 0 : i32
    %c0_i32_0 = arith.constant 0 : i32
    return %arg0, %c0_i32 : i32, i32
  }
  func.func @transform_1(%arg0: i32) -> (i32, i32) {
    %c0_i32 = arith.constant 0 : i32
    %c0_i32_0 = arith.constant 0 : i32
    %c0_i32_1 = arith.constant 0 : i32
    return %c0_i32, %c0_i32_0 : i32, i32
  }
  func.func @transform_2(%arg0: i32) -> (i32, i32) {
    %c0_i32 = arith.constant 0 : i32
    %c0_i32_0 = arith.constant 0 : i32
    %c0_i32_1 = arith.constant 0 : i32
    return %c0_i32, %c0_i32_0 : i32, i32
  }
  func.func @transform_3(%arg0: i32) -> (i32, i32) {
    %c0_i32 = arith.constant 0 : i32
    %c0_i32_0 = arith.constant 0 : i32
    %c0_i32_1 = arith.constant 0 : i32
    return %c0_i32, %c0_i32_0 : i32, i32
  }
  func.func @transform_4(%arg0: i32) -> (i32, i32) {
    %c0_i32 = arith.constant 0 : i32
    %c0_i32_0 = arith.constant 0 : i32
    %c0_i32_1 = arith.constant 0 : i32
    return %c0_i32, %c0_i32_0 : i32, i32
  }
  func.func @transform_5(%arg0: i32) -> (i32, i32) {
    %c0_i32 = arith.constant 0 : i32
    %c0_i32_0 = arith.constant 0 : i32
    %c0_i32_1 = arith.constant 0 : i32
    return %c0_i32, %c0_i32_0 : i32, i32
  }
  func.func @transform_6(%arg0: i32) -> (i32, i32) {
    %c0_i32 = arith.constant 0 : i32
    %c0_i32_0 = arith.constant 0 : i32
    %c0_i32_1 = arith.constant 0 : i32
    return %c0_i32, %c0_i32_0 : i32, i32
  }
  func.func @transform_7(%arg0: i32) -> (i32, i32) {
    %c0_i32 = arith.constant 0 : i32
    %c0_i32_0 = arith.constant 0 : i32
    return %arg0, %c0_i32 : i32, i32
  }
  func.func @transform_8(%arg0: i32) -> (i32, i32) {
    %c0_i32 = arith.constant 0 : i32
    %c0_i32_0 = arith.constant 0 : i32
    return %arg0, %c0_i32 : i32, i32
  }
  func.func @transform_9(%arg0: i32) -> (i32, i32) {
    %c0_i32 = arith.constant 0 : i32
    %c0_i32_0 = arith.constant 0 : i32
    return %arg0, %c0_i32 : i32, i32
  }
}

</mosaic_0001>

<llo_original>
// kernel: tpu_custom_call.1
$region0: #{tpu_custom_call.1}
  #allocation0 [shape = 'u32[]', space=smem, size = 0x4, offset = 0x4, fixed_abs, tag = 'smem constant byte address 0x4 - core index']
  #allocation1 [shape = 'u32[144,128]{1,0:T(1,128)}', space=vmem, size = 0x12000, scoped, tag = 'internal scratch']
  %s0 = inlined_call_operand.vmem [shape: bf16[16,128], index: 0, kind: input, shape index: {}]
  %s1 = inlined_call_operand.hbm [shape: bf16[128,128], index: 1, kind: input, shape index: {}]
  %s2 = inlined_call_operand.vmem [shape: f32[1,128], index: 2, kind: input, shape index: {}]
  %s3 = inlined_call_operand.hbm [shape: bf16[128,128], index: 3, kind: input, shape index: {}]
  %s4 = inlined_call_operand.vmem [shape: f32[1,128], index: 4, kind: input, shape index: {}]
  %s5 = inlined_call_operand.hbm [shape: bf16[128,128], index: 5, kind: input, shape index: {}]
  %s6 = inlined_call_operand.vmem [shape: f32[1,128], index: 6, kind: input, shape index: {}]
  %s7 = inlined_call_operand.vmem [shape: f32[16,128], index: 7, kind: input, shape index: {}]
  %s8 = inlined_call_operand.vmem [shape: f32[16,1], index: 8, kind: input, shape index: {}]
  %s9 = inlined_call_operand.hbm [shape: f32[16,128], index: 9, kind: output, shape index: {}]
  %s10 = sld [smem:[#allocation0]]
  $region58: #{tpu_custom_call.1} parent=0
    _
  %s12 = ssub.s32 1, %s10
  %s13 = scalar_select 0, %s12, %s10
  $region1: #{tpu_custom_call.1} parent=0
    #allocation2 [shape = 'u8[32768]{0}', space=vmem, size = 0x8000, scoped, tag = 'input window, operand 1, single buffered']
    #allocation3 [shape = 's32[1]{0}', space=sflag, size = 0x4, scoped, tag = 'scoped memory for tpu_custom_call.1']
    #allocation4 [shape = 's32[1]{0}', space=sflag, size = 0x4, scoped, tag = 'scoped memory for tpu_custom_call.1']
    #allocation5 [shape = 'u8[32768]{0}', space=vmem, size = 0x8000, scoped, tag = 'input window, operand 3, single buffered']
    #allocation6 [shape = 's32[1]{0}', space=sflag, size = 0x4, scoped, tag = 'scoped memory for tpu_custom_call.1']
    #allocation7 [shape = 'u8[32768]{0}', space=vmem, size = 0x8000, scoped, tag = 'input window, operand 5, single buffered']
    #allocation8 [shape = 'u8[8192]{0}', space=vmem, size = 0x2000, scoped, tag = 'output window, operand 0, single buffered']
    %14 = vsyncpa [#allocation3], 0
    %15 = vsyncpa [#allocation6], 0
    %16 = vsyncpa [#allocation4], 0
    // Predicated region
    $region2: #{tpu_custom_call.1} parent=1 // pred_check
      _
    $region3: #{tpu_custom_call.1} parent=1 // pred_check_branch
      %18 = sbr.rel (0) target = $region5
    $region4: #{tpu_custom_call.1} parent=1 // pred_region
      _
    $region5: #{tpu_custom_call.1} parent=1 // pred_fallthru
      _
    // Predicated region
    $region6: #{tpu_custom_call.1} parent=1 // pred_check
      _
    $region7: #{tpu_custom_call.1} parent=1 // pred_check_branch
      %20 = sbr.rel (0) target = $region9
    $region8: #{tpu_custom_call.1} parent=1 // pred_region
      %s22 = ssub.s32 1024, 1024
      %23 = vsyncadd [#allocation3], %s22
      %s24 = sshll.u32 [#allocation2], 4
      %s25 = int_to_ptr.vmem [resolvable:$true] %s24
      %30 = dma.hbm_to_vmem [thread:$0]  %s1, 1024, %s25, [#allocation3], 64, 64, 4
    $region9: #{tpu_custom_call.1} parent=1 // pred_fallthru
      _
    // Predicated region
    $region10: #{tpu_custom_call.1} parent=1 // pred_check
      _
    $region11: #{tpu_custom_call.1} parent=1 // pred_check_branch
      %32 = sbr.rel (0) target = $region13
    $region12: #{tpu_custom_call.1} parent=1 // pred_region
      _
    $region13: #{tpu_custom_call.1} parent=1 // pred_fallthru
      _
    // Predicated region
    $region14: #{tpu_custom_call.1} parent=1 // pred_check
      _
    $region15: #{tpu_custom_call.1} parent=1 // pred_check_branch
      %34 = sbr.rel (0) target = $region17
    $region16: #{tpu_custom_call.1} parent=1 // pred_region
      %s36 = ssub.s32 1024, 1024
      %37 = vsyncadd [#allocation6], %s36
      %s38 = sshll.u32 [#allocation5], 4
      %s39 = int_to_ptr.vmem [resolvable:$true] %s38
      %44 = dma.hbm_to_vmem [thread:$0]  %s3, 1024, %s39, [#allocation6], 64, 64, 4
    $region17: #{tpu_custom_call.1} parent=1 // pred_fallthru
      _
    // Predicated region
    $region18: #{tpu_custom_call.1} parent=1 // pred_check
      _
    $region19: #{tpu_custom_call.1} parent=1 // pred_check_branch
      %46 = sbr.rel (0) target = $region21
    $region20: #{tpu_custom_call.1} parent=1 // pred_region
      _
    $region21: #{tpu_custom_call.1} parent=1 // pred_fallthru
      _
    // Predicated region
    $region22: #{tpu_custom_call.1} parent=1 // pred_check
      _
    $region23: #{tpu_custom_call.1} parent=1 // pred_check_branch
      %48 = sbr.rel (0) target = $region25
    $region24: #{tpu_custom_call.1} parent=1 // pred_region
      %s50 = ssub.s32 1024, 1024
      %51 = vsyncadd [#allocation6], %s50
      %s52 = sshll.u32 [#allocation7], 4
      %s53 = int_to_ptr.vmem [resolvable:$true] %s52
      %58 = dma.hbm_to_vmem [thread:$0]  %s5, 1024, %s53, [#allocation6], 64, 64, 4
    $region25: #{tpu_custom_call.1} parent=1 // pred_fallthru
      _
    // Predicated region
    $region26: #{tpu_custom_call.1} parent=1 // pred_check
      _
    $region27: #{tpu_custom_call.1} parent=1 // pred_check_branch
      %60 = sbr.rel (0) target = $region29
    $region28: #{tpu_custom_call.1} parent=1 // pred_region
      _
    $region29: #{tpu_custom_call.1} parent=1 // pred_fallthru
      _
    // Predicated region
    $region30: #{tpu_custom_call.1} parent=1 // pred_check
      _
    $region31: #{tpu_custom_call.1} parent=1 // pred_check_branch
      %62 = sbr.rel (0) target = $region33
    $region32: #{tpu_custom_call.1} parent=1 // pred_region
      _
    $region33: #{tpu_custom_call.1} parent=1 // pred_fallthru
      _
    // Predicated region
    $region34: #{tpu_custom_call.1} parent=1 // pred_check
      _
    $region35: #{tpu_custom_call.1} parent=1 // pred_check_branch
      %64 = sbr.rel (0) target = $region37
    $region36: #{tpu_custom_call.1} parent=1 // pred_region
      _
    $region37: #{tpu_custom_call.1} parent=1 // pred_fallthru
      _
    // Predicated region
    $region38: #{tpu_custom_call.1} parent=1 // pred_check
      _
    $region39: #{tpu_custom_call.1} parent=1 // pred_check_branch
      %66 = sbr.rel (0) target = $region41
    $region40: #{tpu_custom_call.1} parent=1 // pred_region
      %67 = dma.done [#allocation3], 1024
    $region41: #{tpu_custom_call.1} parent=1 // pred_fallthru
      _
    // Predicated region
    $region42: #{tpu_custom_call.1} parent=1 // pred_check
      _
    $region43: #{tpu_custom_call.1} parent=1 // pred_check_branch
      %69 = sbr.rel (0) target = $region45
    $region44: #{tpu_custom_call.1} parent=1 // pred_region
      %70 = dma.done [#allocation6], 1024
    $region45: #{tpu_custom_call.1} parent=1 // pred_fallthru
      _
    // Predicated region
    $region46: #{tpu_custom_call.1} parent=1 // pred_check
      _
    $region47: #{tpu_custom_call.1} parent=1 // pred_check_branch
      %72 = sbr.rel (0) target = $region49
    $region48: #{tpu_custom_call.1} parent=1 // pred_region
      %73 = dma.done [#allocation6], 1024
    $region49: #{tpu_custom_call.1} parent=1 // pred_fallthru
      _
    %v75 = vld [vmem:[%s0] sm:$0xf]
    %v76 = vld [vmem:[%s0 + $0x4] sm:$0xf]
    %v77 = vld [vmem:[#allocation2] sm:$0xf]
    %v78 = vld [vmem:[#allocation2 + $0x4] sm:$0xf]
    %v79 = vld [vmem:[#allocation2 + $0x8] sm:$0xf]
    %v80 = vld [vmem:[#allocation2 + $0xc] sm:$0xf]
    %v81 = vld [vmem:[#allocation2 + $0x10] sm:$0xf]
    %v82 = vld [vmem:[#allocation2 + $0x14] sm:$0xf]
    %v83 = vld [vmem:[#allocation2 + $0x18] sm:$0xf]
    %v84 = vld [vmem:[#allocation2 + $0x1c] sm:$0xf]
    %v85 = vld [vmem:[#allocation2 + $0x20] sm:$0xf]
    %v86 = vld [vmem:[#allocation2 + $0x24] sm:$0xf]
    %v87 = vld [vmem:[#allocation2 + $0x28] sm:$0xf]
    %v88 = vld [vmem:[#allocation2 + $0x2c] sm:$0xf]
    %v89 = vld [vmem:[#allocation2 + $0x30] sm:$0xf]
    %v90 = vld [vmem:[#allocation2 + $0x34] sm:$0xf]
    %v91 = vld [vmem:[#allocation2 + $0x38] sm:$0xf]
    %v92 = vld [vmem:[#allocation2 + $0x3c] sm:$0xf]
    %v93 = vld [vmem:[%s2] sm:$0x1]
    %v95 = vlaneseq
    %v96 = vshrl.u32 %v95, 7
    %v97 = vsub.s32 0, %v96
    %v98 = vrot.slane %v93, %v97
    %v102 = vunpack.c.l.b16 %v75
    %v103 = vunpack.c.l.b16 %v76
    %v104 = vpack.c.b16 %v103, %v102
    %v122 = vunpack.c.l.b16 %v77
    %v123 = vunpack.c.l.b16 %v78
    %v124 = vunpack.c.l.b16 %v79
    %v125 = vunpack.c.l.b16 %v80
    %v126 = vunpack.c.l.b16 %v81
    %v127 = vunpack.c.l.b16 %v82
    %v128 = vunpack.c.l.b16 %v83
    %v129 = vunpack.c.l.b16 %v84
    %v130 = vunpack.c.l.b16 %v85
    %v131 = vunpack.c.l.b16 %v86
    %v132 = vunpack.c.l.b16 %v87
    %v133 = vunpack.c.l.b16 %v88
    %v134 = vunpack.c.l.b16 %v89
    %v135 = vunpack.c.l.b16 %v90
    %v136 = vunpack.c.l.b16 %v91
    %v137 = vunpack.c.l.b16 %v92
    %v138 = vpack.c.b16 %v123, %v122
    %v139 = vpack.c.b16 %v125, %v124
    %v140 = vpack.c.b16 %v127, %v126
    %v141 = vpack.c.b16 %v129, %v128
    %v142 = vpack.c.b16 %v131, %v130
    %v143 = vpack.c.b16 %v133, %v132
    %v144 = vpack.c.b16 %v135, %v134
    %v145 = vpack.c.b16 %v137, %v136
    %154 = vmatprep.subr.bf16.mxu0 0
    %155 = vmatpush1.bf16.msra.mxu0 %v138
    %156 = vmatprep.subr.bf16.mxu0 0
    %157 = vmatpush1.bf16.msra.mxu0 %v139
    %158 = vmatprep.subr.bf16.mxu0 0
    %159 = vmatpush1.bf16.msra.mxu0 %v140
    %160 = vmatprep.subr.bf16.mxu0 0
    %161 = vmatpush1.bf16.msra.mxu0 %v141
    %162 = vmatprep.subr.bf16.mxu0 0
    %163 = vmatpush1.bf16.msra.mxu0 %v142
    %164 = vmatprep.subr.bf16.mxu0 0
    %165 = vmatpush1.bf16.msra.mxu0 %v143
    %166 = vmatprep.subr.bf16.mxu0 0
    %167 = vmatpush1.bf16.msra.mxu0 %v144
    %168 = vmatprep.subr.bf16.mxu0 0
    %169 = vmatpush1.bf16.msra.mxu0 %v145
    %170 = vmatprep.subr.bf16.mxu0 0
    %171 = vmatpush1.bf16.msra.mxu0 0
    %172 = vmatprep.subr.bf16.mxu0 0
    %173 = vmatpush1.bf16.msra.mxu0 0
    %174 = vmatprep.subr.bf16.mxu0 0
    %175 = vmatpush1.bf16.msra.mxu0 0
    %176 = vmatprep.subr.bf16.mxu0 0
    %177 = vmatpush1.bf16.msra.mxu0 0
    %178 = vmatprep.subr.bf16.mxu0 0
    %179 = vmatpush1.bf16.msra.mxu0 0
    %180 = vmatprep.subr.bf16.mxu0 0
    %181 = vmatpush1.bf16.msra.mxu0 0
    %182 = vmatprep.subr.bf16.mxu0 0
    %183 = vmatpush1.bf16.msra.mxu0 0
    %184 = vmatprep.subr.bf16.mxu0 0
    %185 = vmatpush1.bf16.msra.mxu0 0
    %186 = vmatprep.mubr.bf16.mxu0 0
    %187 = vmatmul.mubr.bf16.gmra.mrb[0].mxu0 %v104
    %v188 = vpop.f32.mrb[0].mxu0
    %v189 = vadd.f32 %v98, %v188
    %v190 = vpop.f32.mrb[0].mxu0
    %v191 = vpop.f32.mrb[0].mxu0
    %v192 = vadd.f32 %v98, %v191
    %v193 = vpop.f32.mrb[0].mxu0
    %194 = vdwg.mxu0
    %v195 = vmin.f32 %v189, 20.0
    %v196 = vmin.f32 %v192, 20.0
    %v197 = vmul.f32 %v195, 1.442695
    %v198 = vpow.pop %v197
    %v199 = vmul.f32 %v196, 1.442695
    %v200 = vpow.pop %v199
    %v201 = vadd.f32 %v198, 2.0
    %v202 = vadd.f32 %v200, 2.0
    %v203 = vmul.f32 %v198, %v201
    %v204 = vmul.f32 %v200, %v202
    %v205 = vmul.f32 %v189, %v203
    %v206 = vmul.f32 %v192, %v204
    %v207 = vadd.f32 %v203, 2.0
    %v208 = vadd.f32 %v204, 2.0
    %v209 = vrcp.pop %v207
    %v210 = vrcp.pop %v208
    %v211 = vmul.f32 %v205, %v209
    %v212 = vmul.f32 %v206, %v210
    %v213 = vpack.c.bf16 %v212, %v211
    %v214 = vld [vmem:[#allocation5] sm:$0xf]
    %v215 = vld [vmem:[#allocation5 + $0x4] sm:$0xf]
    %v216 = vld [vmem:[#allocation5 + $0x8] sm:$0xf]
    %v217 = vld [vmem:[#allocation5 + $0xc] sm:$0xf]
    %v218 = vld [vmem:[#allocation5 + $0x10] sm:$0xf]
    %v219 = vld [vmem:[#allocation5 + $0x14] sm:$0xf]
    %v220 = vld [vmem:[#allocation5 + $0x18] sm:$0xf]
    %v221 = vld [vmem:[#allocation5 + $0x1c] sm:$0xf]
    %v222 = vld [vmem:[#allocation5 + $0x20] sm:$0xf]
    %v223 = vld [vmem:[#allocation5 + $0x24] sm:$0xf]
    %v224 = vld [vmem:[#allocation5 + $0x28] sm:$0xf]
    %v225 = vld [vmem:[#allocation5 + $0x2c] sm:$0xf]
    %v226 = vld [vmem:[#allocation5 + $0x30] sm:$0xf]
    %v227 = vld [vmem:[#allocation5 + $0x34] sm:$0xf]
    %v228 = vld [vmem:[#allocation5 + $0x38] sm:$0xf]
    %v229 = vld [vmem:[#allocation5 + $0x3c] sm:$0xf]
    %v230 = vld [vmem:[%s4] sm:$0x1]
    %v232 = vlaneseq
    %v233 = vshrl.u32 %v232, 7
    %v234 = vsub.s32 0, %v233
    %v235 = vrot.slane %v230, %v234
    %v253 = vunpack.c.l.b16 %v214
    %v254 = vunpack.c.l.b16 %v215
    %v255 = vunpack.c.l.b16 %v216
    %v256 = vunpack.c.l.b16 %v217
    %v257 = vunpack.c.l.b16 %v218
    %v258 = vunpack.c.l.b16 %v219
    %v259 = vunpack.c.l.b16 %v220
    %v260 = vunpack.c.l.b16 %v221
    %v261 = vunpack.c.l.b16 %v222
    %v262 = vunpack.c.l.b16 %v223
    %v263 = vunpack.c.l.b16 %v224
    %v264 = vunpack.c.l.b16 %v225
    %v265 = vunpack.c.l.b16 %v226
    %v266 = vunpack.c.l.b16 %v227
    %v267 = vunpack.c.l.b16 %v228
    %v268 = vunpack.c.l.b16 %v229
    %v269 = vpack.c.b16 %v254, %v253
    %v270 = vpack.c.b16 %v256, %v255
    %v271 = vpack.c.b16 %v258, %v257
    %v272 = vpack.c.b16 %v260, %v259
    %v273 = vpack.c.b16 %v262, %v261
    %v274 = vpack.c.b16 %v264, %v263
    %v275 = vpack.c.b16 %v266, %v265
    %v276 = vpack.c.b16 %v268, %v267
    %285 = vmatprep.subr.bf16.mxu0 0
    %286 = vmatpush1.bf16.msra.mxu0 %v269
    %287 = vmatprep.subr.bf16.mxu0 0
    %288 = vmatpush1.bf16.msra.mxu0 %v270
    %289 = vmatprep.subr.bf16.mxu0 0
    %290 = vmatpush1.bf16.msra.mxu0 %v271
    %291 = vmatprep.subr.bf16.mxu0 0
    %292 = vmatpush1.bf16.msra.mxu0 %v272
    %293 = vmatprep.subr.bf16.mxu0 0
    %294 = vmatpush1.bf16.msra.mxu0 %v273
    %295 = vmatprep.subr.bf16.mxu0 0
    %296 = vmatpush1.bf16.msra.mxu0 %v274
    %297 = vmatprep.subr.bf16.mxu0 0
    %298 = vmatpush1.bf16.msra.mxu0 %v275
    %299 = vmatprep.subr.bf16.mxu0 0
    %300 = vmatpush1.bf16.msra.mxu0 %v276
    %301 = vmatprep.subr.bf16.mxu0 0
    %302 = vmatpush1.bf16.msra.mxu0 0
    %303 = vmatprep.subr.bf16.mxu0 0
    %304 = vmatpush1.bf16.msra.mxu0 0
    %305 = vmatprep.subr.bf16.mxu0 0
    %306 = vmatpush1.bf16.msra.mxu0 0
    %307 = vmatprep.subr.bf16.mxu0 0
    %308 = vmatpush1.bf16.msra.mxu0 0
    %309 = vmatprep.subr.bf16.mxu0 0
    %310 = vmatpush1.bf16.msra.mxu0 0
    %311 = vmatprep.subr.bf16.mxu0 0
    %312 = vmatpush1.bf16.msra.mxu0 0
    %313 = vmatprep.subr.bf16.mxu0 0
    %314 = vmatpush1.bf16.msra.mxu0 0
    %315 = vmatprep.subr.bf16.mxu0 0
    %316 = vmatpush1.bf16.msra.mxu0 0
    %317 = vmatprep.mubr.bf16.mxu0 0
    %318 = vmatmul.mubr.bf16.gmra.mrb[0].mxu0 %v213
    %v319 = vpop.f32.mrb[0].mxu0
    %v320 = vadd.f32 %v235, %v319
    %v321 = vpop.f32.mrb[0].mxu0
    %v322 = vpop.f32.mrb[0].mxu0
    %v323 = vadd.f32 %v235, %v322
    %v324 = vpop.f32.mrb[0].mxu0
    %325 = vdwg.mxu0
    %v326 = vmin.f32 %v320, 20.0
    %v327 = vmin.f32 %v323, 20.0
    %v328 = vmul.f32 %v326, 1.442695
    %v329 = vpow.pop %v328
    %v330 = vmul.f32 %v327, 1.442695
    %v331 = vpow.pop %v330
    %v332 = vadd.f32 %v329, 2.0
    %v333 = vadd.f32 %v331, 2.0
    %v334 = vmul.f32 %v329, %v332
    %v335 = vmul.f32 %v331, %v333
    %v336 = vmul.f32 %v320, %v334
    %v337 = vmul.f32 %v323, %v335
    %v338 = vadd.f32 %v334, 2.0
    %v339 = vadd.f32 %v335, 2.0
    %v340 = vrcp.pop %v338
    %v341 = vrcp.pop %v339
    %v342 = vmul.f32 %v336, %v340
    %v343 = vmul.f32 %v337, %v341
    %v344 = vpack.c.bf16 %v343, %v342
    %v345 = vld [vmem:[#allocation7] sm:$0xf]
    %v346 = vld [vmem:[#allocation7 + $0x4] sm:$0xf]
    %v347 = vld [vmem:[#allocation7 + $0x8] sm:$0xf]
    %v348 = vld [vmem:[#allocation7 + $0xc] sm:$0xf]
    %v349 = vld [vmem:[#allocation7 + $0x10] sm:$0xf]
    %v350 = vld [vmem:[#allocation7 + $0x14] sm:$0xf]
    %v351 = vld [vmem:[#allocation7 + $0x18] sm:$0xf]
    %v352 = vld [vmem:[#allocation7 + $0x1c] sm:$0xf]
    %v353 = vld [vmem:[#allocation7 + $0x20] sm:$0xf]
    %v354 = vld [vmem:[#allocation7 + $0x24] sm:$0xf]
    %v355 = vld [vmem:[#allocation7 + $0x28] sm:$0xf]
    %v356 = vld [vmem:[#allocation7 + $0x2c] sm:$0xf]
    %v357 = vld [vmem:[#allocation7 + $0x30] sm:$0xf]
    %v358 = vld [vmem:[#allocation7 + $0x34] sm:$0xf]
    %v359 = vld [vmem:[#allocation7 + $0x38] sm:$0xf]
    %v360 = vld [vmem:[#allocation7 + $0x3c] sm:$0xf]
    %v361 = vld [vmem:[%s6] sm:$0x1]
    %v363 = vlaneseq
    %v364 = vshrl.u32 %v363, 7
    %v365 = vsub.s32 0, %v364
    %v366 = vrot.slane %v361, %v365
    %v384 = vunpack.c.l.b16 %v345
    %v385 = vunpack.c.l.b16 %v346
    %v386 = vunpack.c.l.b16 %v347
    %v387 = vunpack.c.l.b16 %v348
    %v388 = vunpack.c.l.b16 %v349
    %v389 = vunpack.c.l.b16 %v350
    %v390 = vunpack.c.l.b16 %v351
    %v391 = vunpack.c.l.b16 %v352
    %v392 = vunpack.c.l.b16 %v353
    %v393 = vunpack.c.l.b16 %v354
    %v394 = vunpack.c.l.b16 %v355
    %v395 = vunpack.c.l.b16 %v356
    %v396 = vunpack.c.l.b16 %v357
    %v397 = vunpack.c.l.b16 %v358
    %v398 = vunpack.c.l.b16 %v359
    %v399 = vunpack.c.l.b16 %v360
    %v400 = vpack.c.b16 %v385, %v384
    %v401 = vpack.c.b16 %v387, %v386
    %v402 = vpack.c.b16 %v389, %v388
    %v403 = vpack.c.b16 %v391, %v390
    %v404 = vpack.c.b16 %v393, %v392
    %v405 = vpack.c.b16 %v395, %v394
    %v406 = vpack.c.b16 %v397, %v396
    %v407 = vpack.c.b16 %v399, %v398
    %416 = vmatprep.subr.bf16.mxu0 0
    %417 = vmatpush1.bf16.msra.mxu0 %v400
    %418 = vmatprep.subr.bf16.mxu0 0
    %419 = vmatpush1.bf16.msra.mxu0 %v401
    %420 = vmatprep.subr.bf16.mxu0 0
    %421 = vmatpush1.bf16.msra.mxu0 %v402
    %422 = vmatprep.subr.bf16.mxu0 0
    %423 = vmatpush1.bf16.msra.mxu0 %v403
    %424 = vmatprep.subr.bf16.mxu0 0
    %425 = vmatpush1.bf16.msra.mxu0 %v404
    %426 = vmatprep.subr.bf16.mxu0 0
    %427 = vmatpush1.bf16.msra.mxu0 %v405
    %428 = vmatprep.subr.bf16.mxu0 0
    %429 = vmatpush1.bf16.msra.mxu0 %v406
    %430 = vmatprep.subr.bf16.mxu0 0
    %431 = vmatpush1.bf16.msra.mxu0 %v407
    %432 = vmatprep.subr.bf16.mxu0 0
    %433 = vmatpush1.bf16.msra.mxu0 0
    %434 = vmatprep.subr.bf16.mxu0 0
    %435 = vmatpush1.bf16.msra.mxu0 0
    %436 = vmatprep.subr.bf16.mxu0 0
    %437 = vmatpush1.bf16.msra.mxu0 0
    %438 = vmatprep.subr.bf16.mxu0 0
    %439 = vmatpush1.bf16.msra.mxu0 0
    %440 = vmatprep.subr.bf16.mxu0 0
    %441 = vmatpush1.bf16.msra.mxu0 0
    %442 = vmatprep.subr.bf16.mxu0 0
    %443 = vmatpush1.bf16.msra.mxu0 0
    %444 = vmatprep.subr.bf16.mxu0 0
    %445 = vmatpush1.bf16.msra.mxu0 0
    %446 = vmatprep.subr.bf16.mxu0 0
    %447 = vmatpush1.bf16.msra.mxu0 0
    %448 = vmatprep.mubr.bf16.mxu0 0
    %449 = vmatmul.mubr.bf16.gmra.mrb[0].mxu0 %v344
    %v450 = vpop.f32.mrb[0].mxu0
    %v451 = vadd.f32 %v366, %v450
    %v452 = vpop.f32.mrb[0].mxu0
    %v453 = vpop.f32.mrb[0].mxu0
    %v454 = vadd.f32 %v366, %v453
    %v455 = vpop.f32.mrb[0].mxu0
    %456 = vdwg.mxu0
    %v457 = vld [vmem:[%s8] sm:$0xff]
    %v458 = vld [vmem:[%s8 + $0x8] sm:$0xff]
    %vm459 = vcmp.gt.f32.partialorder %v457, 0.0
    %vm460 = vcmp.gt.f32.partialorder %v458, 0.0
    %v461 = vld [vmem:[%s7] sm:$0xff]
    %v462 = vld [vmem:[%s7 + $0x8] sm:$0xff]
    %v463 = vsel %vm459, 1, 0
    %v464 = vsel %vm460, 1, 0
    %465 = vset.pattern.permute.xlu0 0
    %466 = vperm.xlu0 %465, %v463
    %v467 = vpop.permute.xlu0 %466
    %468 = vset.pattern.permute.xlu0 0
    %469 = vperm.xlu0 %468, %v464
    %v470 = vpop.permute.xlu0 %469
    %vm471 = vcmp.eq.s32.totalorder %v467, 1
    %vm472 = vcmp.eq.s32.totalorder %v470, 1
    %v473 = vsel %vm471, %v461, %v451
    %v474 = vsel %vm472, %v462, %v454
    %v475 = vmul.f32 %v473, %v473
    %v476 = vmul.f32 %v474, %v474
    %477 = vadd.xlane.f32.xlu0 %v475
    %v478 = vpop.xlane.xlu0 %477
    %479 = vadd.xlane.f32.xlu0 %v476
    %v480 = vpop.xlane.xlu0 %479
    %v481 = vmax.f32 %v478, 1e-24
    %v482 = vmax.f32 %v480, 1e-24
    %v483 = vrsqrt.pop %v481
    %v484 = vrsqrt.pop %v482
    %v485 = vmul.f32 %v473, %v483
    %v486 = vmul.f32 %v474, %v484
    %487 = vst [vmem:[#allocation8] sm:$0xff] %v485
    %488 = vst [vmem:[#allocation8 + $0x8] sm:$0xff] %v486
    // Predicated region
    $region50: #{tpu_custom_call.1} parent=1 // pred_check
      _
    $region51: #{tpu_custom_call.1} parent=1 // pred_check_branch
      %490 = sbr.rel (0) target = $region53
    $region52: #{tpu_custom_call.1} parent=1 // pred_region
      %s492 = ssub.s32 256, 256
      %493 = vsyncadd [#allocation4], %s492
      %s494 = sshll.u32 [#allocation8], 4
      %s495 = int_to_ptr.vmem [resolvable:$true] %s494
      %500 = dma.vmem_to_hbm [thread:$0]  %s495, 256, %s9, [#allocation4], 128, 128, 8
    $region53: #{tpu_custom_call.1} parent=1 // pred_fallthru
      _
    // Predicated region
    $region54: #{tpu_custom_call.1} parent=1 // pred_check
      _
    $region55: #{tpu_custom_call.1} parent=1 // pred_check_branch
      %502 = sbr.rel (0) target = $region57
    $region56: #{tpu_custom_call.1} parent=1 // pred_region
      %503 = dma.done [#allocation4], 256
    $region57: #{tpu_custom_call.1} parent=1 // pred_fallthru
      _
    %504 = vsyncpa [#allocation3], 1
    %505 = vsyncpa [#allocation6], 1
    %506 = vsyncpa [#allocation4], 1

</llo_original>
